<compile_context>
chip_gen: v7x
topology: tpu7x:2x2x1
jax: 0.10.0
libtpu: 0.0.40
codegen_flags: <defaults>
</compile_context>

<pallas_src>
import jax
import jax.numpy as jnp
from jax.experimental import pallas as pl
from jax.experimental.pallas import tpu as pltpu


def _round_up(n, m):
    return ((n + m - 1) // m) * m


def qnetwork_kernel(x_ref, a_ref,
                    ws1_ref, bs1_ref,
                    wa1_ref, ba1_ref,
                    wq1s_ref, wq1a_ref, bq1_ref,
                    wq2_ref, bq2_ref,
                    q_ref):
    # hS = relu(Ws1 @ x + bs1)                       (16, TB)
    hs = jnp.dot(ws1_ref[...], x_ref[...], preferred_element_type=jnp.float32)
    hs = jnp.maximum(hs + bs1_ref[...], 0.0)

    # hA = relu(Wa1 @ a + ba1)                       (16, TB)
    ha = jnp.dot(wa1_ref[...], a_ref[...], preferred_element_type=jnp.float32)
    ha = jnp.maximum(ha + ba1_ref[...], 0.0)

    # fcQ1 on cat([hS, hA]) == Wq1[:, :16] @ hS + Wq1[:, 16:] @ hA
    z = (jnp.dot(wq1s_ref[...], hs, preferred_element_type=jnp.float32)
         + jnp.dot(wq1a_ref[...], ha, preferred_element_type=jnp.float32)
         + bq1_ref[...])
    h3 = jnp.maximum(z, 0.0)                         # (16, TB)

    # q = Wq2 @ h3 + bq2                             (1, TB) lane-dense store
    q = jnp.dot(wq2_ref[...], h3, preferred_element_type=jnp.float32)
    q_ref[...] = (q + bq2_ref[...]).astype(q_ref.dtype)


def _choose_batch_tile(B):
    """Lane-tile for the batch axis.

    - multiple of 128 (lane width)
    - tiny batches: one step (splitting only adds per-step overhead)
    - big batches: at least 2 grid steps so v7x's 2 TensorCores both get work
    - capped at 16384 lanes: whole double-buffered footprint (~6 MiB f32) fits
      v5e's 16 MiB default scoped VMEM, so no vmem_limit override needed.
    """
    lanes = _round_up(B, 128)
    if lanes <= 256:
        return lanes
    return min(16384, _round_up(pl.cdiv(lanes, 2), 128))


def prepare_params(params):
    """One-time weight prep (hoisted out of the per-call path)."""
    ws1, bs1 = params["fcS1"]   # (16, 4), (16,)
    wa1, ba1 = params["fcA1"]   # (16, 1), (16,)
    wq1, bq1 = params["fcQ1"]   # (16, 32), (16,)
    wq2, bq2 = params["fcQ2"]   # (1, 16), (1,)
    return (ws1, bs1.reshape(16, 1),
            wa1, ba1.reshape(16, 1),
            wq1[:, :16], wq1[:, 16:], bq1.reshape(16, 1),
            wq2, bq2.reshape(1, 1))


def qnetwork_forward(x, a, prepared):
    """x: (B, 4) f32, a: (B, 1) f32 -> q: (B, 1) f32."""
    B = x.shape[0]
    (ws1, bs1, wa1, ba1, wq1s, wq1a, bq1, wq2, bq2) = prepared

    TB = _choose_batch_tile(B)
    Bp = _round_up(B, TB)
    grid = (Bp // TB,)

    # Batch-on-lanes: (features, batch). Pad the batch axis up to a tile multiple.
    xt = x.T                                   # (4, B)
    at = a.T                                   # (1, B)
    if Bp != B:
        pad = ((0, 0), (0, Bp - B))
        xt = jnp.pad(xt, pad)
        at = jnp.pad(at, pad)

    def resident(shape):
        # Weight / bias stays pinned in VMEM across all batch tiles.
        return pl.BlockSpec(shape, lambda i: (0, 0))

    q_pad = pl.pallas_call(
        qnetwork_kernel,
        out_shape=jax.ShapeDtypeStruct((1, Bp), jnp.float32),
        grid_spec=pltpu.PrefetchScalarGridSpec(
            num_scalar_prefetch=0,
            grid=grid,
            in_specs=[
                pl.BlockSpec((4, TB), lambda i: (0, i)),   # x batch tile
                pl.BlockSpec((1, TB), lambda i: (0, i)),   # a batch tile
                resident((16, 4)),                         # Ws1
                resident((16, 1)),                         # bs1
                resident((16, 1)),                         # Wa1
                resident((16, 1)),                         # ba1
                resident((16, 16)),                        # Wq1[:, :16]
                resident((16, 16)),                        # Wq1[:, 16:]
                resident((16, 1)),                         # bq1
                resident((1, 16)),                         # Wq2
                resident((1, 1)),                          # bq2
            ],
            out_specs=pl.BlockSpec((1, TB), lambda i: (0, i)),
        ),
        compiler_params=pltpu.CompilerParams(
            dimension_semantics=("parallel",)),            # 2-TC shard on v7x
    )(xt, at, ws1, bs1, wa1, ba1, wq1s, wq1a, bq1, wq2, bq2)

    return q_pad[:, :B].T                                  # (B, 1)


# JIT the whole forward so transpose/pad/kernel/slice/transpose fuse into one
# XLA program instead of separate HBM round trips.
qnetwork_forward_jit = jax.jit(qnetwork_forward)


def init_params(key):
    """Deterministic init mirroring torch.nn.Linear default U(-1/sqrt(fan_in), +...)."""
    def linear(k, out_f, in_f):
        kw, kb = jax.random.split(k)
        bound = 1.0 / (in_f ** 0.5)
        w = jax.random.uniform(kw, (out_f, in_f), jnp.float32, -bound, bound)
        b = jax.random.uniform(kb, (out_f,), jnp.float32, -bound, bound)
        return w, b

    k1, k2, k3, k4 = jax.random.split(key, 4)
    return {
        "fcS1": linear(k1, 16, 4),
        "fcA1": linear(k2, 16, 1),
        "fcQ1": linear(k3, 16, 32),
        "fcQ2": linear(k4, 1, 16),
    }


def reference_forward(x, a, params):
    """Plain-JAX reference identical to the PyTorch forward."""
    ws1, bs1 = params["fcS1"]
    wa1, ba1 = params["fcA1"]
    wq1, bq1 = params["fcQ1"]
    wq2, bq2 = params["fcQ2"]
    h1 = jnp.maximum(x @ ws1.T + bs1, 0.0)
    h2 = jnp.maximum(a @ wa1.T + ba1, 0.0)
    cat = jnp.concatenate([h1, h2], axis=-1)
    q = jnp.maximum(cat @ wq1.T + bq1, 0.0)
    return q @ wq2.T + bq2


if __name__ == "__main__":
    key = jax.random.PRNGKey(0)
    kp, kx, ka = jax.random.split(key, 3)

    params = init_params(kp)
    prepared = prepare_params(params)

    B = 8
    x = jax.random.normal(kx, (B, 4), jnp.float32)   # state (e.g. CartPole obs)
    a = jax.random.normal(ka, (B, 1), jnp.float32)   # action

    q = qnetwork_forward_jit(x, a, prepared)
    q = jax.block_until_ready(q)

    q_ref = reference_forward(x, a, params)
    assert q.shape == (B, 1)
    assert jnp.allclose(q, q_ref, atol=1e-5, rtol=1e-5), "mismatch vs reference"

    print("KERNEL_OK")
</pallas_src>

<mosaic_0001>
module attributes {stable_mosaic.version = 11 : i64} {
  func.func @qnetwork_kernel(%arg0: i32, %arg1: memref<4x128xf32, #tpu.memory_space<vmem>>, %arg2: memref<1x128xf32, #tpu.memory_space<vmem>>, %arg3: memref<16x4xf32, #tpu.memory_space<vmem>>, %arg4: memref<16x1xf32, #tpu.memory_space<vmem>>, %arg5: memref<16x1xf32, #tpu.memory_space<vmem>>, %arg6: memref<16x1xf32, #tpu.memory_space<vmem>>, %arg7: memref<16x16xf32, #tpu.memory_space<vmem>>, %arg8: memref<16x16xf32, #tpu.memory_space<vmem>>, %arg9: memref<16x1xf32, #tpu.memory_space<vmem>>, %arg10: memref<1x16xf32, #tpu.memory_space<vmem>>, %arg11: memref<1x1xf32, #tpu.memory_space<vmem>>, %arg12: memref<1x128xf32, #tpu.memory_space<vmem>>) attributes {dimension_semantics = [#tpu.dimension_semantics<parallel>], iteration_bounds = array<i64: 1>, scalar_prefetch = 0 : i64, scratch_operands = 0 : i64, tpu.core_type = #tpu.core_type<tc>, window_params = [{transform_indices = @transform_0, window_bounds = array<i64: 4, 128>}, {transform_indices = @transform_1, window_bounds = array<i64: 1, 128>}, {pipeline_mode = #tpu.pipeline_mode<synchronous>, transform_indices = @transform_2, window_bounds = array<i64: 16, 4>}, {pipeline_mode = #tpu.pipeline_mode<synchronous>, transform_indices = @transform_3, window_bounds = array<i64: 16, 1>}, {pipeline_mode = #tpu.pipeline_mode<synchronous>, transform_indices = @transform_4, window_bounds = array<i64: 16, 1>}, {pipeline_mode = #tpu.pipeline_mode<synchronous>, transform_indices = @transform_5, window_bounds = array<i64: 16, 1>}, {pipeline_mode = #tpu.pipeline_mode<synchronous>, transform_indices = @transform_6, window_bounds = array<i64: 16, 16>}, {pipeline_mode = #tpu.pipeline_mode<synchronous>, transform_indices = @transform_7, window_bounds = array<i64: 16, 16>}, {pipeline_mode = #tpu.pipeline_mode<synchronous>, transform_indices = @transform_8, window_bounds = array<i64: 16, 1>}, {pipeline_mode = #tpu.pipeline_mode<synchronous>, transform_indices = @transform_9, window_bounds = array<i64: 1, 16>}, {pipeline_mode = #tpu.pipeline_mode<synchronous>, transform_indices = @transform_10, window_bounds = array<i64: 1, 1>}, {transform_indices = @transform_11, window_bounds = array<i64: 1, 128>}]} {
    %c0 = arith.constant 0 : index
    %c0_0 = arith.constant 0 : index
    %0 = vector.load %arg3[%c0, %c0_0] : memref<16x4xf32, #tpu.memory_space<vmem>>, vector<16x4xf32>
    %c0_1 = arith.constant 0 : index
    %c0_2 = arith.constant 0 : index
    %1 = vector.load %arg1[%c0_1, %c0_2] : memref<4x128xf32, #tpu.memory_space<vmem>>, vector<4x128xf32>
    %cst = arith.constant dense<0.000000e+00> : vector<16x128xf32>
    %2 = tpu.matmul %0, %1, %cst {dimension_numbers = #tpu.dot_dimension_numbers<[1], [0], [0], [1], [0, 0, 1, 1], [], []>} : vector<16x4xf32>, vector<4x128xf32>, vector<16x128xf32> -> vector<16x128xf32>
    %c0_3 = arith.constant 0 : index
    %c0_4 = arith.constant 0 : index
    %3 = vector.load %arg4[%c0_3, %c0_4] : memref<16x1xf32, #tpu.memory_space<vmem>>, vector<16x1xf32>
    %4 = vector.broadcast %3 : vector<16x1xf32> to vector<16x128xf32>
    %5 = arith.addf %2, %4 : vector<16x128xf32>
    %cst_5 = arith.constant 0.000000e+00 : f32
    %6 = vector.broadcast %cst_5 : f32 to vector<16x128xf32>
    %7 = arith.maximumf %5, %6 : vector<16x128xf32>
    %c0_6 = arith.constant 0 : index
    %c0_7 = arith.constant 0 : index
    %8 = vector.load %arg5[%c0_6, %c0_7] : memref<16x1xf32, #tpu.memory_space<vmem>>, vector<16x1xf32>
    %c0_8 = arith.constant 0 : index
    %c0_9 = arith.constant 0 : index
    %9 = vector.load %arg2[%c0_8, %c0_9] : memref<1x128xf32, #tpu.memory_space<vmem>>, vector<1x128xf32>
    %cst_10 = arith.constant dense<0.000000e+00> : vector<16x128xf32>
    %10 = tpu.matmul %8, %9, %cst_10 {dimension_numbers = #tpu.dot_dimension_numbers<[1], [0], [0], [1], [0, 0, 1, 1], [], []>} : vector<16x1xf32>, vector<1x128xf32>, vector<16x128xf32> -> vector<16x128xf32>
    %c0_11 = arith.constant 0 : index
    %c0_12 = arith.constant 0 : index
    %11 = vector.load %arg6[%c0_11, %c0_12] : memref<16x1xf32, #tpu.memory_space<vmem>>, vector<16x1xf32>
    %12 = vector.broadcast %11 : vector<16x1xf32> to vector<16x128xf32>
    %13 = arith.addf %10, %12 : vector<16x128xf32>
    %cst_13 = arith.constant 0.000000e+00 : f32
    %14 = vector.broadcast %cst_13 : f32 to vector<16x128xf32>
    %15 = arith.maximumf %13, %14 : vector<16x128xf32>
    %c0_14 = arith.constant 0 : index
    %c0_15 = arith.constant 0 : index
    %16 = vector.load %arg7[%c0_14, %c0_15] : memref<16x16xf32, #tpu.memory_space<vmem>>, vector<16x16xf32>
    %cst_16 = arith.constant dense<0.000000e+00> : vector<16x128xf32>
    %17 = tpu.matmul %16, %7, %cst_16 {dimension_numbers = #tpu.dot_dimension_numbers<[1], [0], [0], [1], [0, 0, 1, 1], [], []>} : vector<16x16xf32>, vector<16x128xf32>, vector<16x128xf32> -> vector<16x128xf32>
    %c0_17 = arith.constant 0 : index
    %c0_18 = arith.constant 0 : index
    %18 = vector.load %arg8[%c0_17, %c0_18] : memref<16x16xf32, #tpu.memory_space<vmem>>, vector<16x16xf32>
    %cst_19 = arith.constant dense<0.000000e+00> : vector<16x128xf32>
    %19 = tpu.matmul %18, %15, %cst_19 {dimension_numbers = #tpu.dot_dimension_numbers<[1], [0], [0], [1], [0, 0, 1, 1], [], []>} : vector<16x16xf32>, vector<16x128xf32>, vector<16x128xf32> -> vector<16x128xf32>
    %20 = arith.addf %17, %19 : vector<16x128xf32>
    %c0_20 = arith.constant 0 : index
    %c0_21 = arith.constant 0 : index
    %21 = vector.load %arg9[%c0_20, %c0_21] : memref<16x1xf32, #tpu.memory_space<vmem>>, vector<16x1xf32>
    %22 = vector.broadcast %21 : vector<16x1xf32> to vector<16x128xf32>
    %23 = arith.addf %20, %22 : vector<16x128xf32>
    %cst_22 = arith.constant 0.000000e+00 : f32
    %24 = vector.broadcast %cst_22 : f32 to vector<16x128xf32>
    %25 = arith.maximumf %23, %24 : vector<16x128xf32>
    %c0_23 = arith.constant 0 : index
    %c0_24 = arith.constant 0 : index
    %26 = vector.load %arg10[%c0_23, %c0_24] : memref<1x16xf32, #tpu.memory_space<vmem>>, vector<1x16xf32>
    %cst_25 = arith.constant dense<0.000000e+00> : vector<1x128xf32>
    %27 = tpu.matmul %26, %25, %cst_25 {dimension_numbers = #tpu.dot_dimension_numbers<[1], [0], [0], [1], [0, 0, 1, 1], [], []>} : vector<1x16xf32>, vector<16x128xf32>, vector<1x128xf32> -> vector<1x128xf32>
    %c0_26 = arith.constant 0 : index
    %c0_27 = arith.constant 0 : index
    %28 = vector.load %arg11[%c0_26, %c0_27] : memref<1x1xf32, #tpu.memory_space<vmem>>, vector<1x1xf32>
    %29 = vector.broadcast %28 : vector<1x1xf32> to vector<1x128xf32>
    %30 = arith.addf %27, %29 : vector<1x128xf32>
    %c0_28 = arith.constant 0 : index
    %c0_29 = arith.constant 0 : index
    %31 = vector.load %arg12[%c0_28, %c0_29] : memref<1x128xf32, #tpu.memory_space<vmem>>, vector<1x128xf32>
    tpu.vector_store %arg12[%c0_28, %c0_29], %30 {strides = array<i32>} : memref<1x128xf32, #tpu.memory_space<vmem>>, vector<1x128xf32>,
    return
  }
  func.func @transform_0(%arg0: i32) -> (i32, i32) {
    %c0_i32 = arith.constant 0 : i32
    %c0_i32_0 = arith.constant 0 : i32
    return %c0_i32, %arg0 : i32, i32
  }
  func.func @transform_1(%arg0: i32) -> (i32, i32) {
    %c0_i32 = arith.constant 0 : i32
    %c0_i32_0 = arith.constant 0 : i32
    return %c0_i32, %arg0 : i32, i32
  }
  func.func @transform_2(%arg0: i32) -> (i32, i32) {
    %c0_i32 = arith.constant 0 : i32
    %c0_i32_0 = arith.constant 0 : i32
    %c0_i32_1 = arith.constant 0 : i32
    return %c0_i32, %c0_i32_0 : i32, i32
  }
  func.func @transform_3(%arg0: i32) -> (i32, i32) {
    %c0_i32 = arith.constant 0 : i32
    %c0_i32_0 = arith.constant 0 : i32
    %c0_i32_1 = arith.constant 0 : i32
    return %c0_i32, %c0_i32_0 : i32, i32
  }
  func.func @transform_4(%arg0: i32) -> (i32, i32) {
    %c0_i32 = arith.constant 0 : i32
    %c0_i32_0 = arith.constant 0 : i32
    %c0_i32_1 = arith.constant 0 : i32
    return %c0_i32, %c0_i32_0 : i32, i32
  }
  func.func @transform_5(%arg0: i32) -> (i32, i32) {
    %c0_i32 = arith.constant 0 : i32
    %c0_i32_0 = arith.constant 0 : i32
    %c0_i32_1 = arith.constant 0 : i32
    return %c0_i32, %c0_i32_0 : i32, i32
  }
  func.func @transform_6(%arg0: i32) -> (i32, i32) {
    %c0_i32 = arith.constant 0 : i32
    %c0_i32_0 = arith.constant 0 : i32
    %c0_i32_1 = arith.constant 0 : i32
    return %c0_i32, %c0_i32_0 : i32, i32
  }
  func.func @transform_7(%arg0: i32) -> (i32, i32) {
    %c0_i32 = arith.constant 0 : i32
    %c0_i32_0 = arith.constant 0 : i32
    %c0_i32_1 = arith.constant 0 : i32
    return %c0_i32, %c0_i32_0 : i32, i32
  }
  func.func @transform_8(%arg0: i32) -> (i32, i32) {
    %c0_i32 = arith.constant 0 : i32
    %c0_i32_0 = arith.constant 0 : i32
    %c0_i32_1 = arith.constant 0 : i32
    return %c0_i32, %c0_i32_0 : i32, i32
  }
  func.func @transform_9(%arg0: i32) -> (i32, i32) {
    %c0_i32 = arith.constant 0 : i32
    %c0_i32_0 = arith.constant 0 : i32
    %c0_i32_1 = arith.constant 0 : i32
    return %c0_i32, %c0_i32_0 : i32, i32
  }
  func.func @transform_10(%arg0: i32) -> (i32, i32) {
    %c0_i32 = arith.constant 0 : i32
    %c0_i32_0 = arith.constant 0 : i32
    %c0_i32_1 = arith.constant 0 : i32
    return %c0_i32, %c0_i32_0 : i32, i32
  }
  func.func @transform_11(%arg0: i32) -> (i32, i32) {
    %c0_i32 = arith.constant 0 : i32
    %c0_i32_0 = arith.constant 0 : i32
    return %c0_i32, %arg0 : i32, i32
  }
}

</mosaic_0001>

<llo_original>
// kernel: qnetwork_forward.1
$region0: #{qnetwork_forward.1}
  #allocation0 [shape = 'u32[]', space=smem, size = 0x4, offset = 0x4, fixed_abs, tag = 'smem constant byte address 0x4 - core index']
  #allocation1 [shape = 'u32[144,128]{1,0:T(1,128)}', space=vmem, size = 0x12000, scoped, tag = 'internal scratch']
  #allocation2 [shape = 'f32[1,1]{1,0:T(1,128)S(1)}', space=vmem, size = 0x200, scoped, tag = 'scoped memory for qnetwork_forward.1']
  %s0 = inlined_call_operand.vmem [shape: f32[4,128], index: 0, kind: input, shape index: {}]
  %s1 = inlined_call_operand.vmem [shape: f32[1,128], index: 1, kind: input, shape index: {}]
  %s2 = inlined_call_operand.vmem [shape: f32[16,4], index: 2, kind: input, shape index: {}]
  %s3 = inlined_call_operand.vmem [shape: f32[16,1], index: 3, kind: input, shape index: {}]
  %s4 = inlined_call_operand.vmem [shape: f32[16,1], index: 4, kind: input, shape index: {}]
  %s5 = inlined_call_operand.vmem [shape: f32[16,1], index: 5, kind: input, shape index: {}]
  %s6 = inlined_call_operand.vmem [shape: f32[16,16], index: 6, kind: input, shape index: {}]
  %s7 = inlined_call_operand.vmem [shape: f32[16,16], index: 7, kind: input, shape index: {}]
  %s8 = inlined_call_operand.vmem [shape: f32[16,1], index: 8, kind: input, shape index: {}]
  %s9 = inlined_call_operand.vmem [shape: f32[1,16], index: 9, kind: input, shape index: {}]
  %s10 = inlined_call_operand.<no memory space> [shape: f32[1,1], index: 10, kind: input, shape index: {}]
  %s11 = inlined_call_operand.vmem [shape: f32[1,128], index: 11, kind: output, shape index: {}]
  %s12 = sld [smem:[#allocation0]]
  $region54: #{qnetwork_forward.1} parent=0
    _
  %s14 = ssub.s32 1, %s12
  %s15 = scalar_select 0, %s14, %s12
  %v16 = vstv %s10
  %17 = vst [vmem:[#allocation2] sm:$0x1] %v16
  // Predicated region
  $region2: #{qnetwork_forward.1} parent=0 // pred_check
    _
  $region3: #{qnetwork_forward.1} parent=0 // pred_check_branch
    %19 = sbr.rel (0) target = $region5
  $region4: #{qnetwork_forward.1} parent=0 // pred_region
    _
  $region5: #{qnetwork_forward.1} parent=0 // pred_fallthru
    _
  // Predicated region
  $region6: #{qnetwork_forward.1} parent=0 // pred_check
    _
  $region7: #{qnetwork_forward.1} parent=0 // pred_check_branch
    %21 = sbr.rel (0) target = $region9
  $region8: #{qnetwork_forward.1} parent=0 // pred_region
    _
  $region9: #{qnetwork_forward.1} parent=0 // pred_fallthru
    _
  // Predicated region
  $region10: #{qnetwork_forward.1} parent=0 // pred_check
    _
  $region11: #{qnetwork_forward.1} parent=0 // pred_check_branch
    %23 = sbr.rel (0) target = $region13
  $region12: #{qnetwork_forward.1} parent=0 // pred_region
    _
  $region13: #{qnetwork_forward.1} parent=0 // pred_fallthru
    _
  // Predicated region
  $region14: #{qnetwork_forward.1} parent=0 // pred_check
    _
  $region15: #{qnetwork_forward.1} parent=0 // pred_check_branch
    %25 = sbr.rel (0) target = $region17
  $region16: #{qnetwork_forward.1} parent=0 // pred_region
    _
  $region17: #{qnetwork_forward.1} parent=0 // pred_fallthru
    _
  // Predicated region
  $region18: #{qnetwork_forward.1} parent=0 // pred_check
    _
  $region19: #{qnetwork_forward.1} parent=0 // pred_check_branch
    %27 = sbr.rel (0) target = $region21
  $region20: #{qnetwork_forward.1} parent=0 // pred_region
    _
  $region21: #{qnetwork_forward.1} parent=0 // pred_fallthru
    _
  // Predicated region
  $region22: #{qnetwork_forward.1} parent=0 // pred_check
    _
  $region23: #{qnetwork_forward.1} parent=0 // pred_check_branch
    %29 = sbr.rel (0) target = $region25
  $region24: #{qnetwork_forward.1} parent=0 // pred_region
    _
  $region25: #{qnetwork_forward.1} parent=0 // pred_fallthru
    _
  // Predicated region
  $region26: #{qnetwork_forward.1} parent=0 // pred_check
    _
  $region27: #{qnetwork_forward.1} parent=0 // pred_check_branch
    %31 = sbr.rel (0) target = $region29
  $region28: #{qnetwork_forward.1} parent=0 // pred_region
    _
  $region29: #{qnetwork_forward.1} parent=0 // pred_fallthru
    _
  // Predicated region
  $region30: #{qnetwork_forward.1} parent=0 // pred_check
    _
  $region31: #{qnetwork_forward.1} parent=0 // pred_check_branch
    %33 = sbr.rel (0) target = $region33
  $region32: #{qnetwork_forward.1} parent=0 // pred_region
    _
  $region33: #{qnetwork_forward.1} parent=0 // pred_fallthru
    _
  // Predicated region
  $region34: #{qnetwork_forward.1} parent=0 // pred_check
    _
  $region35: #{qnetwork_forward.1} parent=0 // pred_check_branch
    %35 = sbr.rel (0) target = $region37
  $region36: #{qnetwork_forward.1} parent=0 // pred_region
    _
  $region37: #{qnetwork_forward.1} parent=0 // pred_fallthru
    _
  // Predicated region
  $region38: #{qnetwork_forward.1} parent=0 // pred_check
    _
  $region39: #{qnetwork_forward.1} parent=0 // pred_check_branch
    %37 = sbr.rel (0) target = $region41
  $region40: #{qnetwork_forward.1} parent=0 // pred_region
    _
  $region41: #{qnetwork_forward.1} parent=0 // pred_fallthru
    _
  // Predicated region
  $region42: #{qnetwork_forward.1} parent=0 // pred_check
    _
  $region43: #{qnetwork_forward.1} parent=0 // pred_check_branch
    %39 = sbr.rel (0) target = $region45
  $region44: #{qnetwork_forward.1} parent=0 // pred_region
    _
  $region45: #{qnetwork_forward.1} parent=0 // pred_fallthru
    _
  %v40 = vld [vmem:[%s2] sm:$0xff]
  %v41 = vld [vmem:[%s2 + $0x8] sm:$0xff]
  %v42 = vld [vmem:[%s0] sm:$0xf]
  %v43 = vld [vmem:[%s3] sm:$0xff]
  %v44 = vld [vmem:[%s3 + $0x8] sm:$0xff]
  %46 = vset.pattern.permute.xlu0 0
  %47 = vperm.xlu0 %46, %v43
  %v48 = vpop.permute.xlu0 %47
  %51 = vset.pattern.permute.xlu0 0
  %52 = vperm.xlu0 %51, %v44
  %v53 = vpop.permute.xlu0 %52
  %vm55 = vcmask 31744
  %v57 = vsel %vm55, %v40, 0
  %v60 = vsel %vm55, %v41, 0
  %vm62 = vcmask 1043456
  %v64 = vsel %vm62, %v42, 0
  %66 = vmatprep.subr.mxu0 0.0
  %67 = vmatpush1.msra.mxu0 %v64
  %68 = vmatprep.subr.mxu0 0.0
  %69 = vmatpush1.msra.mxu0 0.0
  %70 = vmatprep.subr.mxu0 0.0
  %71 = vmatpush1.msra.mxu0 0.0
  %72 = vmatprep.subr.mxu0 0.0
  %73 = vmatpush1.msra.mxu0 0.0
  %74 = vmatprep.subr.mxu0 0.0
  %75 = vmatpush1.msra.mxu0 0.0
  %76 = vmatprep.subr.mxu0 0.0
  %77 = vmatpush1.msra.mxu0 0.0
  %78 = vmatprep.subr.mxu0 0.0
  %79 = vmatpush1.msra.mxu0 0.0
  %80 = vmatprep.subr.mxu0 0.0
  %81 = vmatpush1.msra.mxu0 0.0
  %82 = vmatprep.subr.mxu0 0.0
  %83 = vmatpush1.msra.mxu0 0.0
  %84 = vmatprep.subr.mxu0 0.0
  %85 = vmatpush1.msra.mxu0 0.0
  %86 = vmatprep.subr.mxu0 0.0
  %87 = vmatpush1.msra.mxu0 0.0
  %88 = vmatprep.subr.mxu0 0.0
  %89 = vmatpush1.msra.mxu0 0.0
  %90 = vmatprep.subr.mxu0 0.0
  %91 = vmatpush1.msra.mxu0 0.0
  %92 = vmatprep.subr.mxu0 0.0
  %93 = vmatpush1.msra.mxu0 0.0
  %94 = vmatprep.subr.mxu0 0.0
  %95 = vmatpush1.msra.mxu0 0.0
  %96 = vmatprep.subr.mxu0 0.0
  %97 = vmatpush1.msra.mxu0 0.0
  %98 = vmatprep.subr.mxu0 0.0
  %99 = vmatpush1.msra.mxu0 0.0
  %100 = vmatprep.subr.mxu0 0.0
  %101 = vmatpush1.msra.mxu0 0.0
  %102 = vmatprep.subr.mxu0 0.0
  %103 = vmatpush1.msra.mxu0 0.0
  %104 = vmatprep.subr.mxu0 0.0
  %105 = vmatpush1.msra.mxu0 0.0
  %106 = vmatprep.subr.mxu0 0.0
  %107 = vmatpush1.msra.mxu0 0.0
  %108 = vmatprep.subr.mxu0 0.0
  %109 = vmatpush1.msra.mxu0 0.0
  %110 = vmatprep.subr.mxu0 0.0
  %111 = vmatpush1.msra.mxu0 0.0
  %112 = vmatprep.subr.mxu0 0.0
  %113 = vmatpush1.msra.mxu0 0.0
  %114 = vmatprep.subr.mxu0 0.0
  %115 = vmatpush1.msra.mxu0 0.0
  %116 = vmatprep.subr.mxu0 0.0
  %117 = vmatpush1.msra.mxu0 0.0
  %118 = vmatprep.subr.mxu0 0.0
  %119 = vmatpush1.msra.mxu0 0.0
  %120 = vmatprep.subr.mxu0 0.0
  %121 = vmatpush1.msra.mxu0 0.0
  %122 = vmatprep.subr.mxu0 0.0
  %123 = vmatpush1.msra.mxu0 0.0
  %124 = vmatprep.subr.mxu0 0.0
  %125 = vmatpush1.msra.mxu0 0.0
  %126 = vmatprep.subr.mxu0 0.0
  %127 = vmatpush1.msra.mxu0 0.0
  %128 = vmatprep.subr.mxu0 0.0
  %129 = vmatpush1.msra.mxu0 0.0
  %130 = vmatprep.mubr.f32.mxu0 0.0
  %131 = vmatmul.mubr.f32.gmra.mrb[0].mxu0 %v57
  %v132 = vpop.f32.mrb[0].mxu0
  %v133 = vadd.f32 %v48, %v132
  %v134 = vpop.f32.mrb[0].mxu0
  %135 = vmatprep.mubr.f32.mxu0 0.0
  %136 = vmatmul.mubr.f32.gmra.mrb[0].mxu0 %v60
  %v137 = vpop.f32.mrb[0].mxu0
  %v138 = vadd.f32 %v53, %v137
  %v139 = vpop.f32.mrb[0].mxu0
  %140 = vdwg.mxu0
  %v141 = vmax.f32 %v133, 0.0
  %v142 = vmax.f32 %v138, 0.0
  %v143 = vld [vmem:[%s4] sm:$0xff]
  %v144 = vld [vmem:[%s4 + $0x8] sm:$0xff]
  %v145 = vld [vmem:[%s1] sm:$0x1]
  %v146 = vld [vmem:[%s5] sm:$0xff]
  %v147 = vld [vmem:[%s5 + $0x8] sm:$0xff]
  %149 = vset.pattern.permute.xlu0 0
  %150 = vperm.xlu0 %149, %v146
  %v151 = vpop.permute.xlu0 %150
  %154 = vset.pattern.permute.xlu0 0
  %155 = vperm.xlu0 %154, %v147
  %v156 = vpop.permute.xlu0 %155
  %vm158 = vcmask 7168
  %v160 = vsel %vm158, %v143, 0
  %v163 = vsel %vm158, %v144, 0
  %vm165 = vcmask 1040384
  %v167 = vsel %vm165, %v145, 0
  %169 = vmatprep.subr.mxu0 0.0
  %170 = vmatpush1.msra.mxu0 %v167
  %171 = vmatprep.subr.mxu0 0.0
  %172 = vmatpush1.msra.mxu0 0.0
  %173 = vmatprep.subr.mxu0 0.0
  %174 = vmatpush1.msra.mxu0 0.0
  %175 = vmatprep.subr.mxu0 0.0
  %176 = vmatpush1.msra.mxu0 0.0
  %177 = vmatprep.subr.mxu0 0.0
  %178 = vmatpush1.msra.mxu0 0.0
  %179 = vmatprep.subr.mxu0 0.0
  %180 = vmatpush1.msra.mxu0 0.0
  %181 = vmatprep.subr.mxu0 0.0
  %182 = vmatpush1.msra.mxu0 0.0
  %183 = vmatprep.subr.mxu0 0.0
  %184 = vmatpush1.msra.mxu0 0.0
  %185 = vmatprep.subr.mxu0 0.0
  %186 = vmatpush1.msra.mxu0 0.0
  %187 = vmatprep.subr.mxu0 0.0
  %188 = vmatpush1.msra.mxu0 0.0
  %189 = vmatprep.subr.mxu0 0.0
  %190 = vmatpush1.msra.mxu0 0.0
  %191 = vmatprep.subr.mxu0 0.0
  %192 = vmatpush1.msra.mxu0 0.0
  %193 = vmatprep.subr.mxu0 0.0
  %194 = vmatpush1.msra.mxu0 0.0
  %195 = vmatprep.subr.mxu0 0.0
  %196 = vmatpush1.msra.mxu0 0.0
  %197 = vmatprep.subr.mxu0 0.0
  %198 = vmatpush1.msra.mxu0 0.0
  %199 = vmatprep.subr.mxu0 0.0
  %200 = vmatpush1.msra.mxu0 0.0
  %201 = vmatprep.subr.mxu0 0.0
  %202 = vmatpush1.msra.mxu0 0.0
  %203 = vmatprep.subr.mxu0 0.0
  %204 = vmatpush1.msra.mxu0 0.0
  %205 = vmatprep.subr.mxu0 0.0
  %206 = vmatpush1.msra.mxu0 0.0
  %207 = vmatprep.subr.mxu0 0.0
  %208 = vmatpush1.msra.mxu0 0.0
  %209 = vmatprep.subr.mxu0 0.0
  %210 = vmatpush1.msra.mxu0 0.0
  %211 = vmatprep.subr.mxu0 0.0
  %212 = vmatpush1.msra.mxu0 0.0
  %213 = vmatprep.subr.mxu0 0.0
  %214 = vmatpush1.msra.mxu0 0.0
  %215 = vmatprep.subr.mxu0 0.0
  %216 = vmatpush1.msra.mxu0 0.0
  %217 = vmatprep.subr.mxu0 0.0
  %218 = vmatpush1.msra.mxu0 0.0
  %219 = vmatprep.subr.mxu0 0.0
  %220 = vmatpush1.msra.mxu0 0.0
  %221 = vmatprep.subr.mxu0 0.0
  %222 = vmatpush1.msra.mxu0 0.0
  %223 = vmatprep.subr.mxu0 0.0
  %224 = vmatpush1.msra.mxu0 0.0
  %225 = vmatprep.subr.mxu0 0.0
  %226 = vmatpush1.msra.mxu0 0.0
  %227 = vmatprep.subr.mxu0 0.0
  %228 = vmatpush1.msra.mxu0 0.0
  %229 = vmatprep.subr.mxu0 0.0
  %230 = vmatpush1.msra.mxu0 0.0
  %231 = vmatprep.subr.mxu0 0.0
  %232 = vmatpush1.msra.mxu0 0.0
  %233 = vmatprep.mubr.f32.mxu0 0.0
  %234 = vmatmul.mubr.f32.gmra.mrb[0].mxu0 %v160
  %v235 = vpop.f32.mrb[0].mxu0
  %v236 = vadd.f32 %v151, %v235
  %v237 = vpop.f32.mrb[0].mxu0
  %238 = vmatprep.mubr.f32.mxu0 0.0
  %239 = vmatmul.mubr.f32.gmra.mrb[0].mxu0 %v163
  %v240 = vpop.f32.mrb[0].mxu0
  %v241 = vadd.f32 %v156, %v240
  %v242 = vpop.f32.mrb[0].mxu0
  %243 = vdwg.mxu0
  %v244 = vmax.f32 %v236, 0.0
  %v245 = vmax.f32 %v241, 0.0
  %v246 = vld [vmem:[%s6] sm:$0xff]
  %v247 = vld [vmem:[%s6 + $0x8] sm:$0xff]
  %v248 = vld [vmem:[%s7] sm:$0xff]
  %v249 = vld [vmem:[%s7 + $0x8] sm:$0xff]
  %vm250 = vcmask 130048
  %v252 = vsel %vm250, %v248, 0
  %v255 = vsel %vm250, %v249, 0
  %257 = vmatprep.subr.mxu0 0.0
  %258 = vmatpush1.msra.mxu0 %v244
  %259 = vmatprep.subr.mxu0 0.0
  %260 = vmatpush1.msra.mxu0 %v245
  %261 = vmatprep.subr.mxu0 0.0
  %262 = vmatpush1.msra.mxu0 0.0
  %263 = vmatprep.subr.mxu0 0.0
  %264 = vmatpush1.msra.mxu0 0.0
  %265 = vmatprep.subr.mxu0 0.0
  %266 = vmatpush1.msra.mxu0 0.0
  %267 = vmatprep.subr.mxu0 0.0
  %268 = vmatpush1.msra.mxu0 0.0
  %269 = vmatprep.subr.mxu0 0.0
  %270 = vmatpush1.msra.mxu0 0.0
  %271 = vmatprep.subr.mxu0 0.0
  %272 = vmatpush1.msra.mxu0 0.0
  %273 = vmatprep.subr.mxu0 0.0
  %274 = vmatpush1.msra.mxu0 0.0
  %275 = vmatprep.subr.mxu0 0.0
  %276 = vmatpush1.msra.mxu0 0.0
  %277 = vmatprep.subr.mxu0 0.0
  %278 = vmatpush1.msra.mxu0 0.0
  %279 = vmatprep.subr.mxu0 0.0
  %280 = vmatpush1.msra.mxu0 0.0
  %281 = vmatprep.subr.mxu0 0.0
  %282 = vmatpush1.msra.mxu0 0.0
  %283 = vmatprep.subr.mxu0 0.0
  %284 = vmatpush1.msra.mxu0 0.0
  %285 = vmatprep.subr.mxu0 0.0
  %286 = vmatpush1.msra.mxu0 0.0
  %287 = vmatprep.subr.mxu0 0.0
  %288 = vmatpush1.msra.mxu0 0.0
  %289 = vmatprep.subr.mxu0 0.0
  %290 = vmatpush1.msra.mxu0 0.0
  %291 = vmatprep.subr.mxu0 0.0
  %292 = vmatpush1.msra.mxu0 0.0
  %293 = vmatprep.subr.mxu0 0.0
  %294 = vmatpush1.msra.mxu0 0.0
  %295 = vmatprep.subr.mxu0 0.0
  %296 = vmatpush1.msra.mxu0 0.0
  %297 = vmatprep.subr.mxu0 0.0
  %298 = vmatpush1.msra.mxu0 0.0
  %299 = vmatprep.subr.mxu0 0.0
  %300 = vmatpush1.msra.mxu0 0.0
  %301 = vmatprep.subr.mxu0 0.0
  %302 = vmatpush1.msra.mxu0 0.0
  %303 = vmatprep.subr.mxu0 0.0
  %304 = vmatpush1.msra.mxu0 0.0
  %305 = vmatprep.subr.mxu0 0.0
  %306 = vmatpush1.msra.mxu0 0.0
  %307 = vmatprep.subr.mxu0 0.0
  %308 = vmatpush1.msra.mxu0 0.0
  %309 = vmatprep.subr.mxu0 0.0
  %310 = vmatpush1.msra.mxu0 0.0
  %311 = vmatprep.subr.mxu0 0.0
  %312 = vmatpush1.msra.mxu0 0.0
  %313 = vmatprep.subr.mxu0 0.0
  %314 = vmatpush1.msra.mxu0 0.0
  %315 = vmatprep.subr.mxu0 0.0
  %316 = vmatpush1.msra.mxu0 0.0
  %317 = vmatprep.subr.mxu0 0.0
  %318 = vmatpush1.msra.mxu0 0.0
  %319 = vmatprep.subr.mxu0 0.0
  %320 = vmatpush1.msra.mxu0 0.0
  %321 = vmatprep.mubr.f32.mxu0 0.0
  %322 = vmatmul.mubr.f32.gmra.mrb[0].mxu0 %v252
  %v323 = vpop.f32.mrb[0].mxu0
  %v324 = vadd.f32 0.0, %v323
  %v325 = vpop.f32.mrb[0].mxu0
  %326 = vmatprep.mubr.f32.mxu0 0.0
  %327 = vmatmul.mubr.f32.gmra.mrb[0].mxu0 %v255
  %v328 = vpop.f32.mrb[0].mxu0
  %v329 = vadd.f32 0.0, %v328
  %v330 = vpop.f32.mrb[0].mxu0
  %331 = vdwg.mxu0
  %v333 = vsel %vm250, %v246, 0
  %v336 = vsel %vm250, %v247, 0
  %338 = vmatprep.subr.mxu0 0.0
  %339 = vmatpush1.msra.mxu0 %v141
  %340 = vmatprep.subr.mxu0 0.0
  %341 = vmatpush1.msra.mxu0 %v142
  %342 = vmatprep.subr.mxu0 0.0
  %343 = vmatpush1.msra.mxu0 0.0
  %344 = vmatprep.subr.mxu0 0.0
  %345 = vmatpush1.msra.mxu0 0.0
  %346 = vmatprep.subr.mxu0 0.0
  %347 = vmatpush1.msra.mxu0 0.0
  %348 = vmatprep.subr.mxu0 0.0
  %349 = vmatpush1.msra.mxu0 0.0
  %350 = vmatprep.subr.mxu0 0.0
  %351 = vmatpush1.msra.mxu0 0.0
  %352 = vmatprep.subr.mxu0 0.0
  %353 = vmatpush1.msra.mxu0 0.0
  %354 = vmatprep.subr.mxu0 0.0
  %355 = vmatpush1.msra.mxu0 0.0
  %356 = vmatprep.subr.mxu0 0.0
  %357 = vmatpush1.msra.mxu0 0.0
  %358 = vmatprep.subr.mxu0 0.0
  %359 = vmatpush1.msra.mxu0 0.0
  %360 = vmatprep.subr.mxu0 0.0
  %361 = vmatpush1.msra.mxu0 0.0
  %362 = vmatprep.subr.mxu0 0.0
  %363 = vmatpush1.msra.mxu0 0.0
  %364 = vmatprep.subr.mxu0 0.0
  %365 = vmatpush1.msra.mxu0 0.0
  %366 = vmatprep.subr.mxu0 0.0
  %367 = vmatpush1.msra.mxu0 0.0
  %368 = vmatprep.subr.mxu0 0.0
  %369 = vmatpush1.msra.mxu0 0.0
  %370 = vmatprep.subr.mxu0 0.0
  %371 = vmatpush1.msra.mxu0 0.0
  %372 = vmatprep.subr.mxu0 0.0
  %373 = vmatpush1.msra.mxu0 0.0
  %374 = vmatprep.subr.mxu0 0.0
  %375 = vmatpush1.msra.mxu0 0.0
  %376 = vmatprep.subr.mxu0 0.0
  %377 = vmatpush1.msra.mxu0 0.0
  %378 = vmatprep.subr.mxu0 0.0
  %379 = vmatpush1.msra.mxu0 0.0
  %380 = vmatprep.subr.mxu0 0.0
  %381 = vmatpush1.msra.mxu0 0.0
  %382 = vmatprep.subr.mxu0 0.0
  %383 = vmatpush1.msra.mxu0 0.0
  %384 = vmatprep.subr.mxu0 0.0
  %385 = vmatpush1.msra.mxu0 0.0
  %386 = vmatprep.subr.mxu0 0.0
  %387 = vmatpush1.msra.mxu0 0.0
  %388 = vmatprep.subr.mxu0 0.0
  %389 = vmatpush1.msra.mxu0 0.0
  %390 = vmatprep.subr.mxu0 0.0
  %391 = vmatpush1.msra.mxu0 0.0
  %392 = vmatprep.subr.mxu0 0.0
  %393 = vmatpush1.msra.mxu0 0.0
  %394 = vmatprep.subr.mxu0 0.0
  %395 = vmatpush1.msra.mxu0 0.0
  %396 = vmatprep.subr.mxu0 0.0
  %397 = vmatpush1.msra.mxu0 0.0
  %398 = vmatprep.subr.mxu0 0.0
  %399 = vmatpush1.msra.mxu0 0.0
  %400 = vmatprep.subr.mxu0 0.0
  %401 = vmatpush1.msra.mxu0 0.0
  %402 = vmatprep.mubr.f32.mxu0 0.0
  %403 = vmatmul.mubr.f32.gmra.mrb[0].mxu0 %v333
  %v404 = vpop.f32.mrb[0].mxu0
  %v405 = vadd.f32 %v324, %v404
  %v406 = vpop.f32.mrb[0].mxu0
  %407 = vmatprep.mubr.f32.mxu0 0.0
  %408 = vmatmul.mubr.f32.gmra.mrb[0].mxu0 %v336
  %v409 = vpop.f32.mrb[0].mxu0
  %v410 = vadd.f32 %v329, %v409
  %v411 = vpop.f32.mrb[0].mxu0
  %412 = vdwg.mxu0
  %v413 = vld [vmem:[%s8] sm:$0xff]
  %v414 = vld [vmem:[%s8 + $0x8] sm:$0xff]
  %416 = vset.pattern.permute.xlu0 0
  %417 = vperm.xlu0 %416, %v413
  %v418 = vpop.permute.xlu0 %417
  %421 = vset.pattern.permute.xlu0 0
  %422 = vperm.xlu0 %421, %v414
  %v423 = vpop.permute.xlu0 %422
  %v425 = vadd.f32 %v405, %v418
  %v426 = vadd.f32 %v410, %v423
  %v427 = vmax.f32 %v425, 0.0
  %v428 = vmax.f32 %v426, 0.0
  %v429 = vld [vmem:[%s9] sm:$0x1]
  %v430 = vld [vmem:[#allocation2] sm:$0x1]
  %432 = vset.pattern.permute.xlu0 0
  %433 = vperm.xlu0 %432, %v430
  %v434 = vpop.permute.xlu0 %433
  %v436 = vlaneseq
  %v437 = vshrl.u32 %v436, 7
  %v438 = vsub.s32 0, %v437
  %v439 = vrot.slane %v434, %v438
  %v441 = vsel %vm250, %v429, 0
  %443 = vmatprep.subr.mxu0 0.0
  %444 = vmatpush1.msra.mxu0 %v427
  %445 = vmatprep.subr.mxu0 0.0
  %446 = vmatpush1.msra.mxu0 %v428
  %447 = vmatprep.subr.mxu0 0.0
  %448 = vmatpush1.msra.mxu0 0.0
  %449 = vmatprep.subr.mxu0 0.0
  %450 = vmatpush1.msra.mxu0 0.0
  %451 = vmatprep.subr.mxu0 0.0
  %452 = vmatpush1.msra.mxu0 0.0
  %453 = vmatprep.subr.mxu0 0.0
  %454 = vmatpush1.msra.mxu0 0.0
  %455 = vmatprep.subr.mxu0 0.0
  %456 = vmatpush1.msra.mxu0 0.0
  %457 = vmatprep.subr.mxu0 0.0
  %458 = vmatpush1.msra.mxu0 0.0
  %459 = vmatprep.subr.mxu0 0.0
  %460 = vmatpush1.msra.mxu0 0.0
  %461 = vmatprep.subr.mxu0 0.0
  %462 = vmatpush1.msra.mxu0 0.0
  %463 = vmatprep.subr.mxu0 0.0
  %464 = vmatpush1.msra.mxu0 0.0
  %465 = vmatprep.subr.mxu0 0.0
  %466 = vmatpush1.msra.mxu0 0.0
  %467 = vmatprep.subr.mxu0 0.0
  %468 = vmatpush1.msra.mxu0 0.0
  %469 = vmatprep.subr.mxu0 0.0
  %470 = vmatpush1.msra.mxu0 0.0
  %471 = vmatprep.subr.mxu0 0.0
  %472 = vmatpush1.msra.mxu0 0.0
  %473 = vmatprep.subr.mxu0 0.0
  %474 = vmatpush1.msra.mxu0 0.0
  %475 = vmatprep.subr.mxu0 0.0
  %476 = vmatpush1.msra.mxu0 0.0
  %477 = vmatprep.subr.mxu0 0.0
  %478 = vmatpush1.msra.mxu0 0.0
  %479 = vmatprep.subr.mxu0 0.0
  %480 = vmatpush1.msra.mxu0 0.0
  %481 = vmatprep.subr.mxu0 0.0
  %482 = vmatpush1.msra.mxu0 0.0
  %483 = vmatprep.subr.mxu0 0.0
  %484 = vmatpush1.msra.mxu0 0.0
  %485 = vmatprep.subr.mxu0 0.0
  %486 = vmatpush1.msra.mxu0 0.0
  %487 = vmatprep.subr.mxu0 0.0
  %488 = vmatpush1.msra.mxu0 0.0
  %489 = vmatprep.subr.mxu0 0.0
  %490 = vmatpush1.msra.mxu0 0.0
  %491 = vmatprep.subr.mxu0 0.0
  %492 = vmatpush1.msra.mxu0 0.0
  %493 = vmatprep.subr.mxu0 0.0
  %494 = vmatpush1.msra.mxu0 0.0
  %495 = vmatprep.subr.mxu0 0.0
  %496 = vmatpush1.msra.mxu0 0.0
  %497 = vmatprep.subr.mxu0 0.0
  %498 = vmatpush1.msra.mxu0 0.0
  %499 = vmatprep.subr.mxu0 0.0
  %500 = vmatpush1.msra.mxu0 0.0
  %501 = vmatprep.subr.mxu0 0.0
  %502 = vmatpush1.msra.mxu0 0.0
  %503 = vmatprep.subr.mxu0 0.0
  %504 = vmatpush1.msra.mxu0 0.0
  %505 = vmatprep.subr.mxu0 0.0
  %506 = vmatpush1.msra.mxu0 0.0
  %507 = vmatprep.mubr.f32.mxu0 0.0
  %508 = vmatmul.mubr.f32.gmra.mrb[0].mxu0 %v441
  %v509 = vpop.f32.mrb[0].mxu0
  %v510 = vadd.f32 %v439, %v509
  %v511 = vpop.f32.mrb[0].mxu0
  %512 = vdwg.mxu0
  %513 = vst [vmem:[%s11] sm:$0x1] %v510
  // Predicated region
  $region46: #{qnetwork_forward.1} parent=0 // pred_check
    _
  $region47: #{qnetwork_forward.1} parent=0 // pred_check_branch
    %515 = sbr.rel (0) target = $region49
  $region48: #{qnetwork_forward.1} parent=0 // pred_region
    _
  $region49: #{qnetwork_forward.1} parent=0 // pred_fallthru
    _
  // Predicated region
  $region50: #{qnetwork_forward.1} parent=0 // pred_check
    _
  $region51: #{qnetwork_forward.1} parent=0 // pred_check_branch
    %517 = sbr.rel (0) target = $region53
  $region52: #{qnetwork_forward.1} parent=0 // pred_region
    _
  $region53: #{qnetwork_forward.1} parent=0 // pred_fallthru
    _

</llo_original>
